<compile_context>
chip_gen: v7x
topology: tpu7x:2x2x1
jax: 0.10.0
libtpu: 0.0.40
codegen_flags: <defaults>
</compile_context>

<pallas_src>
import jax
import jax.numpy as jnp
from jax.experimental import pallas as pl
from jax.experimental.pallas import tpu as pltpu


def _round_up(x, m):
    return ((x + m - 1) // m) * m


# ----------------------------- Pallas kernel ------------------------------ #
def _encoder_kernel(xt_ref, embt_ref,
                    w0x_ref, w0e_ref, b0_ref,
                    w1_ref, b1_ref,
                    wh_ref, bh_ref,
                    out_ref):
    # Batch is the lane (last) axis everywhere.
    # layer0: h = ReLU(W0x @ x^T + W0e @ emb^T + b0)        [hid0, block_bs]
    h = (jnp.dot(w0x_ref[...], xt_ref[...], preferred_element_type=jnp.float32)
         + jnp.dot(w0e_ref[...], embt_ref[...], preferred_element_type=jnp.float32)
         + b0_ref[...])
    h = jnp.maximum(h, 0.0)

    # layer1: ReLU(W1 @ h + b1)                              [hid1, block_bs]
    h = jnp.dot(w1_ref[...], h.astype(w1_ref.dtype),
                preferred_element_type=jnp.float32) + b1_ref[...]
    h = jnp.maximum(h, 0.0)

    # fused heads (means | log_var stacked on sublanes)      [2*latent, block_bs]
    out_ref[...] = (
        jnp.dot(wh_ref[...], h.astype(wh_ref.dtype),
                preferred_element_type=jnp.float32) + bh_ref[...]
    ).astype(out_ref.dtype)


# ------------------------------ JAX wrapper -------------------------------- #
def encoder_forward(x, emb, params, *, block_bs=None, mxu_dtype=jnp.bfloat16):
    """x: [bs, traj_len], emb: [bs, emb_dim] -> (means, log_var): [bs, latent_dim]."""
    bs, traj_len = x.shape
    emb_dim = emb.shape[1]
    w0, b0, w1, b1, wm, bm, wv, bv = params
    hid0 = w0.shape[1]
    hid1 = w1.shape[1]
    latent_dim = wm.shape[1]
    out_rows = 2 * latent_dim

    # ---- weight re-layout (constant-folded under jit; batch-on-lanes) ----
    w0x_t = w0[:traj_len, :].T.astype(mxu_dtype)              # [hid0, traj_len]
    w0e_t = w0[traj_len:, :].T.astype(mxu_dtype)              # [hid0, emb_dim]
    w1_t = w1.T.astype(mxu_dtype)                             # [hid1, hid0]
    wh_t = jnp.concatenate([wm, wv], axis=1).T.astype(mxu_dtype)   # [2L, hid1]
    b0_c = b0.reshape(hid0, 1).astype(jnp.float32)
    b1_c = b1.reshape(hid1, 1).astype(jnp.float32)
    bh_c = jnp.concatenate([bm, bv], axis=1).reshape(out_rows, 1).astype(jnp.float32)

    # ---- inputs: batch on lanes, MXU dtype ----
    x_t = x.T.astype(mxu_dtype)      # [traj_len, bs]
    emb_t = emb.T.astype(mxu_dtype)  # [emb_dim, bs]

    # ---- batch (lane-axis) tiling; no wrapper padding, ragged last block ----
    if block_bs is None:
        if bs <= 512:
            block_bs = bs                                   # one full block
        else:
            # at least 2 parallel blocks (v7x megacore), big tiles to amortize
            # the ~0.35us per-grid-step overhead; lane tiles must be 128-aligned
            block_bs = min(8192, _round_up(pl.cdiv(bs, 2), 128))
    if block_bs >= bs:
        block_bs = bs                                       # full-extent lane dim
    else:
        block_bs = max(128, (block_bs // 128) * 128)
        if block_bs >= bs:
            block_bs = bs
    grid = (pl.cdiv(bs, block_bs),)

    lane_spec = lambda rows: pl.BlockSpec((rows, block_bs), lambda i: (0, i))
    full_spec = lambda arr: pl.BlockSpec(arr.shape, lambda i: (0, 0))

    grid_spec = pltpu.PrefetchScalarGridSpec(
        num_scalar_prefetch=0,
        grid=grid,
        in_specs=[
            lane_spec(traj_len),             # x^T
            lane_spec(emb_dim),              # emb^T
            full_spec(w0x_t), full_spec(w0e_t), full_spec(b0_c),
            full_spec(w1_t), full_spec(b1_c),
            full_spec(wh_t), full_spec(bh_c),
        ],
        out_specs=lane_spec(out_rows),       # fused (means | log_var), transposed
    )

    out_shape = jax.ShapeDtypeStruct((out_rows, bs), jnp.float32)

    in_bytes = jnp.dtype(mxu_dtype).itemsize
    flops = 2 * bs * ((traj_len + emb_dim) * hid0 + hid0 * hid1 + hid1 * out_rows)
    bytes_accessed = (
        in_bytes * bs * (traj_len + emb_dim)                 # activations in
        + 4 * bs * out_rows                                  # output
        + in_bytes * ((traj_len + emb_dim) * hid0 + hid0 * hid1 + hid1 * out_rows)
        + 4 * (hid0 + hid1 + out_rows))                      # biases

    out = pl.pallas_call(
        _encoder_kernel,
        grid_spec=grid_spec,
        out_shape=out_shape,
        compiler_params=pltpu.CompilerParams(
            dimension_semantics=("parallel",)),
        cost_estimate=pl.CostEstimate(
            flops=flops, transcendentals=0, bytes_accessed=bytes_accessed),
    )(x_t, emb_t, w0x_t, w0e_t, b0_c, w1_t, b1_c, wh_t, bh_c)

    means = out[:latent_dim, :].T        # [bs, latent_dim]
    log_var = out[latent_dim:, :].T      # [bs, latent_dim]
    return means, log_var


# --------------------------- deterministic init ----------------------------- #
def init_params(key, in_dim, enc_layers, latent_dim):
    dims = [in_dim] + list(enc_layers)
    keys = jax.random.split(key, 2 * (len(dims) - 1) + 4)
    params = []
    ki = 0
    for d_in, d_out in zip(dims[:-1], dims[1:]):
        scale = 1.0 / jnp.sqrt(d_in)
        params.append(jax.random.uniform(keys[ki], (d_in, d_out), jnp.float32,
                                         -scale, scale)); ki += 1
        params.append(jax.random.uniform(keys[ki], (1, d_out), jnp.float32,
                                         -scale, scale)); ki += 1
    d_last = dims[-1]
    scale = 1.0 / jnp.sqrt(d_last)
    # means head
    params.append(jax.random.uniform(keys[ki], (d_last, latent_dim), jnp.float32,
                                     -scale, scale)); ki += 1
    params.append(jax.random.uniform(keys[ki], (1, latent_dim), jnp.float32,
                                     -scale, scale)); ki += 1
    # log_var head
    params.append(jax.random.uniform(keys[ki], (d_last, latent_dim), jnp.float32,
                                     -scale, scale)); ki += 1
    params.append(jax.random.uniform(keys[ki], (1, latent_dim), jnp.float32,
                                     -scale, scale)); ki += 1
    return tuple(params)


# pure-JAX f32 reference for correctness checks
def encoder_ref(x, emb, params):
    w0, b0, w1, b1, wm, bm, wv, bv = params
    h = jnp.concatenate([x, emb], axis=1)
    h = jnp.maximum(h @ w0 + b0, 0.0)
    h = jnp.maximum(h @ w1 + b1, 0.0)
    return h @ wm + bm, h @ wv + bv


if __name__ == "__main__":
    # small synthetic cfg:
    #   future_num_frames = 8 -> trajectory_length = 16
    #   emb_dim = 16, encoder_layers = [64, 32], latent_dim = 8
    future_num_frames = 8
    traj_len = future_num_frames * 2
    emb_dim = 16
    encoder_layers = [64, 32]
    latent_dim = 8
    bs = 8

    key = jax.random.PRNGKey(0)
    kx, kemb, kp = jax.random.split(key, 3)
    x = jax.random.normal(kx, (bs, traj_len), jnp.float32)
    emb = jax.random.normal(kemb, (bs, emb_dim), jnp.float32)
    params = init_params(kp, traj_len + emb_dim, encoder_layers, latent_dim)

    # single-block path
    means, log_var = encoder_forward(x, emb, params)
    jax.block_until_ready((means, log_var))
    means_ref, log_var_ref = encoder_ref(x, emb, params)
    assert means.shape == (bs, latent_dim) and log_var.shape == (bs, latent_dim)
    # bf16 MXU operands (f32 accumulation) -> relaxed tolerance vs f32 reference
    assert jnp.allclose(means, means_ref, atol=5e-2, rtol=5e-2)
    assert jnp.allclose(log_var, log_var_ref, atol=5e-2, rtol=5e-2)

    # tiled path: multiple 128-wide lane blocks with a ragged (masked) last block
    bs2 = 300
    x2 = jax.random.normal(kx, (bs2, traj_len), jnp.float32)
    emb2 = jax.random.normal(kemb, (bs2, emb_dim), jnp.float32)
    m2, v2 = encoder_forward(x2, emb2, params, block_bs=128)
    jax.block_until_ready((m2, v2))
    m2_ref, v2_ref = encoder_ref(x2, emb2, params)
    assert m2.shape == (bs2, latent_dim) and v2.shape == (bs2, latent_dim)
    assert jnp.allclose(m2, m2_ref, atol=5e-2, rtol=5e-2)
    assert jnp.allclose(v2, v2_ref, atol=5e-2, rtol=5e-2)

    print("KERNEL_OK")
</pallas_src>

<mosaic_0001>
module attributes {stable_mosaic.version = 11 : i64} {
  func.func @_encoder_kernel(%arg0: i32, %arg1: memref<16x8xbf16, #tpu.memory_space<vmem>>, %arg2: memref<16x8xbf16, #tpu.memory_space<vmem>>, %arg3: memref<64x16xbf16, #tpu.memory_space<vmem>>, %arg4: memref<64x16xbf16, #tpu.memory_space<vmem>>, %arg5: memref<64x1xf32, #tpu.memory_space<vmem>>, %arg6: memref<32x64xbf16, #tpu.memory_space<vmem>>, %arg7: memref<32x1xf32, #tpu.memory_space<vmem>>, %arg8: memref<16x32xbf16, #tpu.memory_space<vmem>>, %arg9: memref<16x1xf32, #tpu.memory_space<vmem>>, %arg10: memref<16x8xf32, #tpu.memory_space<vmem>>) attributes {dimension_semantics = [#tpu.dimension_semantics<parallel>], iteration_bounds = array<i64: 1>, scalar_prefetch = 0 : i64, scratch_operands = 0 : i64, tpu.core_type = #tpu.core_type<tc>, window_params = [{transform_indices = @transform_0, window_bounds = array<i64: 16, 8>}, {transform_indices = @transform_1, window_bounds = array<i64: 16, 8>}, {pipeline_mode = #tpu.pipeline_mode<synchronous>, transform_indices = @transform_2, window_bounds = array<i64: 64, 16>}, {pipeline_mode = #tpu.pipeline_mode<synchronous>, transform_indices = @transform_3, window_bounds = array<i64: 64, 16>}, {pipeline_mode = #tpu.pipeline_mode<synchronous>, transform_indices = @transform_4, window_bounds = array<i64: 64, 1>}, {pipeline_mode = #tpu.pipeline_mode<synchronous>, transform_indices = @transform_5, window_bounds = array<i64: 32, 64>}, {pipeline_mode = #tpu.pipeline_mode<synchronous>, transform_indices = @transform_6, window_bounds = array<i64: 32, 1>}, {pipeline_mode = #tpu.pipeline_mode<synchronous>, transform_indices = @transform_7, window_bounds = array<i64: 16, 32>}, {pipeline_mode = #tpu.pipeline_mode<synchronous>, transform_indices = @transform_8, window_bounds = array<i64: 16, 1>}, {transform_indices = @transform_9, window_bounds = array<i64: 16, 8>}]} {
    %c0 = arith.constant 0 : index
    %c0_0 = arith.constant 0 : index
    %0 = vector.load %arg3[%c0, %c0_0] : memref<64x16xbf16, #tpu.memory_space<vmem>>, vector<64x16xbf16>
    %c0_1 = arith.constant 0 : index
    %c0_2 = arith.constant 0 : index
    %1 = vector.load %arg1[%c0_1, %c0_2] : memref<16x8xbf16, #tpu.memory_space<vmem>>, vector<16x8xbf16>
    %cst = arith.constant dense<0.000000e+00> : vector<64x8xf32>
    %2 = tpu.matmul %0, %1, %cst {dimension_numbers = #tpu.dot_dimension_numbers<[1], [0], [0], [1], [0, 0, 1, 1], [], []>} : vector<64x16xbf16>, vector<16x8xbf16>, vector<64x8xf32> -> vector<64x8xf32>
    %c0_3 = arith.constant 0 : index
    %c0_4 = arith.constant 0 : index
    %3 = vector.load %arg4[%c0_3, %c0_4] : memref<64x16xbf16, #tpu.memory_space<vmem>>, vector<64x16xbf16>
    %c0_5 = arith.constant 0 : index
    %c0_6 = arith.constant 0 : index
    %4 = vector.load %arg2[%c0_5, %c0_6] : memref<16x8xbf16, #tpu.memory_space<vmem>>, vector<16x8xbf16>
    %cst_7 = arith.constant dense<0.000000e+00> : vector<64x8xf32>
    %5 = tpu.matmul %3, %4, %cst_7 {dimension_numbers = #tpu.dot_dimension_numbers<[1], [0], [0], [1], [0, 0, 1, 1], [], []>} : vector<64x16xbf16>, vector<16x8xbf16>, vector<64x8xf32> -> vector<64x8xf32>
    %6 = arith.addf %2, %5 : vector<64x8xf32>
    %c0_8 = arith.constant 0 : index
    %c0_9 = arith.constant 0 : index
    %7 = vector.load %arg5[%c0_8, %c0_9] : memref<64x1xf32, #tpu.memory_space<vmem>>, vector<64x1xf32>
    %8 = vector.broadcast %7 : vector<64x1xf32> to vector<64x8xf32>
    %9 = arith.addf %6, %8 : vector<64x8xf32>
    %cst_10 = arith.constant 0.000000e+00 : f32
    %10 = vector.broadcast %cst_10 : f32 to vector<64x8xf32>
    %11 = arith.maximumf %9, %10 : vector<64x8xf32>
    %c0_11 = arith.constant 0 : index
    %c0_12 = arith.constant 0 : index
    %12 = vector.load %arg6[%c0_11, %c0_12] : memref<32x64xbf16, #tpu.memory_space<vmem>>, vector<32x64xbf16>
    %13 = arith.truncf %11 : vector<64x8xf32> to vector<64x8xbf16>
    %cst_13 = arith.constant dense<0.000000e+00> : vector<32x8xf32>
    %14 = tpu.matmul %12, %13, %cst_13 {dimension_numbers = #tpu.dot_dimension_numbers<[1], [0], [0], [1], [0, 0, 1, 1], [], []>} : vector<32x64xbf16>, vector<64x8xbf16>, vector<32x8xf32> -> vector<32x8xf32>
    %c0_14 = arith.constant 0 : index
    %c0_15 = arith.constant 0 : index
    %15 = vector.load %arg7[%c0_14, %c0_15] : memref<32x1xf32, #tpu.memory_space<vmem>>, vector<32x1xf32>
    %16 = vector.broadcast %15 : vector<32x1xf32> to vector<32x8xf32>
    %17 = arith.addf %14, %16 : vector<32x8xf32>
    %cst_16 = arith.constant 0.000000e+00 : f32
    %18 = vector.broadcast %cst_16 : f32 to vector<32x8xf32>
    %19 = arith.maximumf %17, %18 : vector<32x8xf32>
    %c0_17 = arith.constant 0 : index
    %c0_18 = arith.constant 0 : index
    %20 = vector.load %arg8[%c0_17, %c0_18] : memref<16x32xbf16, #tpu.memory_space<vmem>>, vector<16x32xbf16>
    %21 = arith.truncf %19 : vector<32x8xf32> to vector<32x8xbf16>
    %cst_19 = arith.constant dense<0.000000e+00> : vector<16x8xf32>
    %22 = tpu.matmul %20, %21, %cst_19 {dimension_numbers = #tpu.dot_dimension_numbers<[1], [0], [0], [1], [0, 0, 1, 1], [], []>} : vector<16x32xbf16>, vector<32x8xbf16>, vector<16x8xf32> -> vector<16x8xf32>
    %c0_20 = arith.constant 0 : index
    %c0_21 = arith.constant 0 : index
    %23 = vector.load %arg9[%c0_20, %c0_21] : memref<16x1xf32, #tpu.memory_space<vmem>>, vector<16x1xf32>
    %24 = vector.broadcast %23 : vector<16x1xf32> to vector<16x8xf32>
    %25 = arith.addf %22, %24 : vector<16x8xf32>
    %c0_22 = arith.constant 0 : index
    %c0_23 = arith.constant 0 : index
    %26 = vector.load %arg10[%c0_22, %c0_23] : memref<16x8xf32, #tpu.memory_space<vmem>>, vector<16x8xf32>
    tpu.vector_store %arg10[%c0_22, %c0_23], %25 {strides = array<i32>} : memref<16x8xf32, #tpu.memory_space<vmem>>, vector<16x8xf32>,
    return
  }
  func.func @transform_0(%arg0: i32) -> (i32, i32) {
    %c0_i32 = arith.constant 0 : i32
    %c0_i32_0 = arith.constant 0 : i32
    return %c0_i32, %arg0 : i32, i32
  }
  func.func @transform_1(%arg0: i32) -> (i32, i32) {
    %c0_i32 = arith.constant 0 : i32
    %c0_i32_0 = arith.constant 0 : i32
    return %c0_i32, %arg0 : i32, i32
  }
  func.func @transform_2(%arg0: i32) -> (i32, i32) {
    %c0_i32 = arith.constant 0 : i32
    %c0_i32_0 = arith.constant 0 : i32
    %c0_i32_1 = arith.constant 0 : i32
    return %c0_i32, %c0_i32_0 : i32, i32
  }
  func.func @transform_3(%arg0: i32) -> (i32, i32) {
    %c0_i32 = arith.constant 0 : i32
    %c0_i32_0 = arith.constant 0 : i32
    %c0_i32_1 = arith.constant 0 : i32
    return %c0_i32, %c0_i32_0 : i32, i32
  }
  func.func @transform_4(%arg0: i32) -> (i32, i32) {
    %c0_i32 = arith.constant 0 : i32
    %c0_i32_0 = arith.constant 0 : i32
    %c0_i32_1 = arith.constant 0 : i32
    return %c0_i32, %c0_i32_0 : i32, i32
  }
  func.func @transform_5(%arg0: i32) -> (i32, i32) {
    %c0_i32 = arith.constant 0 : i32
    %c0_i32_0 = arith.constant 0 : i32
    %c0_i32_1 = arith.constant 0 : i32
    return %c0_i32, %c0_i32_0 : i32, i32
  }
  func.func @transform_6(%arg0: i32) -> (i32, i32) {
    %c0_i32 = arith.constant 0 : i32
    %c0_i32_0 = arith.constant 0 : i32
    %c0_i32_1 = arith.constant 0 : i32
    return %c0_i32, %c0_i32_0 : i32, i32
  }
  func.func @transform_7(%arg0: i32) -> (i32, i32) {
    %c0_i32 = arith.constant 0 : i32
    %c0_i32_0 = arith.constant 0 : i32
    %c0_i32_1 = arith.constant 0 : i32
    return %c0_i32, %c0_i32_0 : i32, i32
  }
  func.func @transform_8(%arg0: i32) -> (i32, i32) {
    %c0_i32 = arith.constant 0 : i32
    %c0_i32_0 = arith.constant 0 : i32
    %c0_i32_1 = arith.constant 0 : i32
    return %c0_i32, %c0_i32_0 : i32, i32
  }
  func.func @transform_9(%arg0: i32) -> (i32, i32) {
    %c0_i32 = arith.constant 0 : i32
    %c0_i32_0 = arith.constant 0 : i32
    return %c0_i32, %arg0 : i32, i32
  }
}

</mosaic_0001>

<llo_original>
// kernel: tpu_custom_call.1
$region0: #{tpu_custom_call.1}
  #allocation0 [shape = 'u32[]', space=smem, size = 0x4, offset = 0x4, fixed_abs, tag = 'smem constant byte address 0x4 - core index']
  #allocation1 [shape = 'u32[144,128]{1,0:T(1,128)}', space=vmem, size = 0x12000, scoped, tag = 'internal scratch']
  %s0 = inlined_call_operand.vmem [shape: bf16[16,8], index: 0, kind: input, shape index: {}]
  %s1 = inlined_call_operand.vmem [shape: bf16[16,8], index: 1, kind: input, shape index: {}]
  %s2 = inlined_call_operand.vmem [shape: bf16[64,16], index: 2, kind: input, shape index: {}]
  %s3 = inlined_call_operand.vmem [shape: bf16[64,16], index: 3, kind: input, shape index: {}]
  %s4 = inlined_call_operand.vmem [shape: f32[64,1], index: 4, kind: input, shape index: {}]
  %s5 = inlined_call_operand.vmem [shape: bf16[32,64], index: 5, kind: input, shape index: {}]
  %s6 = inlined_call_operand.vmem [shape: f32[32,1], index: 6, kind: input, shape index: {}]
  %s7 = inlined_call_operand.vmem [shape: bf16[16,32], index: 7, kind: input, shape index: {}]
  %s8 = inlined_call_operand.vmem [shape: f32[16,1], index: 8, kind: input, shape index: {}]
  %s9 = inlined_call_operand.vmem [shape: f32[16,8], index: 9, kind: output, shape index: {}]
  %s10 = sld [smem:[#allocation0]]
  $region46: #{tpu_custom_call.1} parent=0
    _
  %s12 = ssub.s32 1, %s10
  %s13 = scalar_select 0, %s12, %s10
  // Predicated region
  $region2: #{tpu_custom_call.1} parent=0 // pred_check
    _
  $region3: #{tpu_custom_call.1} parent=0 // pred_check_branch
    %15 = sbr.rel (0) target = $region5
  $region4: #{tpu_custom_call.1} parent=0 // pred_region
    _
  $region5: #{tpu_custom_call.1} parent=0 // pred_fallthru
    _
  // Predicated region
  $region6: #{tpu_custom_call.1} parent=0 // pred_check
    _
  $region7: #{tpu_custom_call.1} parent=0 // pred_check_branch
    %17 = sbr.rel (0) target = $region9
  $region8: #{tpu_custom_call.1} parent=0 // pred_region
    _
  $region9: #{tpu_custom_call.1} parent=0 // pred_fallthru
    _
  // Predicated region
  $region10: #{tpu_custom_call.1} parent=0 // pred_check
    _
  $region11: #{tpu_custom_call.1} parent=0 // pred_check_branch
    %19 = sbr.rel (0) target = $region13
  $region12: #{tpu_custom_call.1} parent=0 // pred_region
    _
  $region13: #{tpu_custom_call.1} parent=0 // pred_fallthru
    _
  // Predicated region
  $region14: #{tpu_custom_call.1} parent=0 // pred_check
    _
  $region15: #{tpu_custom_call.1} parent=0 // pred_check_branch
    %21 = sbr.rel (0) target = $region17
  $region16: #{tpu_custom_call.1} parent=0 // pred_region
    _
  $region17: #{tpu_custom_call.1} parent=0 // pred_fallthru
    _
  // Predicated region
  $region18: #{tpu_custom_call.1} parent=0 // pred_check
    _
  $region19: #{tpu_custom_call.1} parent=0 // pred_check_branch
    %23 = sbr.rel (0) target = $region21
  $region20: #{tpu_custom_call.1} parent=0 // pred_region
    _
  $region21: #{tpu_custom_call.1} parent=0 // pred_fallthru
    _
  // Predicated region
  $region22: #{tpu_custom_call.1} parent=0 // pred_check
    _
  $region23: #{tpu_custom_call.1} parent=0 // pred_check_branch
    %25 = sbr.rel (0) target = $region25
  $region24: #{tpu_custom_call.1} parent=0 // pred_region
    _
  $region25: #{tpu_custom_call.1} parent=0 // pred_fallthru
    _
  // Predicated region
  $region26: #{tpu_custom_call.1} parent=0 // pred_check
    _
  $region27: #{tpu_custom_call.1} parent=0 // pred_check_branch
    %27 = sbr.rel (0) target = $region29
  $region28: #{tpu_custom_call.1} parent=0 // pred_region
    _
  $region29: #{tpu_custom_call.1} parent=0 // pred_fallthru
    _
  // Predicated region
  $region30: #{tpu_custom_call.1} parent=0 // pred_check
    _
  $region31: #{tpu_custom_call.1} parent=0 // pred_check_branch
    %29 = sbr.rel (0) target = $region33
  $region32: #{tpu_custom_call.1} parent=0 // pred_region
    _
  $region33: #{tpu_custom_call.1} parent=0 // pred_fallthru
    _
  // Predicated region
  $region34: #{tpu_custom_call.1} parent=0 // pred_check
    _
  $region35: #{tpu_custom_call.1} parent=0 // pred_check_branch
    %31 = sbr.rel (0) target = $region37
  $region36: #{tpu_custom_call.1} parent=0 // pred_region
    _
  $region37: #{tpu_custom_call.1} parent=0 // pred_fallthru
    _
  %v33 = vld [vmem:[%s2] sm:$0xf]
  %v34 = vld [vmem:[%s2 + $0x4] sm:$0xf]
  %v35 = vld [vmem:[%s2 + $0x8] sm:$0xf]
  %v36 = vld [vmem:[%s2 + $0xc] sm:$0xf]
  %v37 = vld [vmem:[%s2 + $0x10] sm:$0xf]
  %v38 = vld [vmem:[%s2 + $0x14] sm:$0xf]
  %v39 = vld [vmem:[%s2 + $0x18] sm:$0xf]
  %v40 = vld [vmem:[%s2 + $0x1c] sm:$0xf]
  %v41 = vld [vmem:[%s0] sm:$0xf]
  %v42 = vld [vmem:[%s0 + $0x4] sm:$0xf]
  %v43 = vld [vmem:[%s3] sm:$0xf]
  %v44 = vld [vmem:[%s3 + $0x4] sm:$0xf]
  %v45 = vld [vmem:[%s3 + $0x8] sm:$0xf]
  %v46 = vld [vmem:[%s3 + $0xc] sm:$0xf]
  %v47 = vld [vmem:[%s3 + $0x10] sm:$0xf]
  %v48 = vld [vmem:[%s3 + $0x14] sm:$0xf]
  %v49 = vld [vmem:[%s3 + $0x18] sm:$0xf]
  %v50 = vld [vmem:[%s3 + $0x1c] sm:$0xf]
  %v51 = vld [vmem:[%s1] sm:$0xf]
  %v52 = vld [vmem:[%s1 + $0x4] sm:$0xf]
  %v61 = vunpack.c.l.b16 %v43
  %v62 = vunpack.c.l.b16 %v44
  %v63 = vunpack.c.l.b16 %v45
  %v64 = vunpack.c.l.b16 %v46
  %v65 = vunpack.c.l.b16 %v47
  %v66 = vunpack.c.l.b16 %v48
  %v67 = vunpack.c.l.b16 %v49
  %v68 = vunpack.c.l.b16 %v50
  %v69 = vpack.c.b16 %v62, %v61
  %v70 = vpack.c.b16 %v64, %v63
  %v71 = vpack.c.b16 %v66, %v65
  %v72 = vpack.c.b16 %v68, %v67
  %v75 = vunpack.c.l.b16 %v51
  %v76 = vunpack.c.l.b16 %v52
  %v77 = vpack.c.b16 %v76, %v75
  %vm79 = vcmask 130048
  %v81 = vsel %vm79, %v69, 0
  %v84 = vsel %vm79, %v70, 0
  %v87 = vsel %vm79, %v71, 0
  %v90 = vsel %vm79, %v72, 0
  %92 = vmatprep.subr.bf16.mxu0 0
  %93 = vmatpush1.bf16.msra.mxu0 %v77
  %94 = vmatprep.subr.bf16.mxu0 0
  %95 = vmatpush1.bf16.msra.mxu0 0
  %96 = vmatprep.subr.bf16.mxu0 0
  %97 = vmatpush1.bf16.msra.mxu0 0
  %98 = vmatprep.subr.bf16.mxu0 0
  %99 = vmatpush1.bf16.msra.mxu0 0
  %100 = vmatprep.subr.bf16.mxu0 0
  %101 = vmatpush1.bf16.msra.mxu0 0
  %102 = vmatprep.subr.bf16.mxu0 0
  %103 = vmatpush1.bf16.msra.mxu0 0
  %104 = vmatprep.subr.bf16.mxu0 0
  %105 = vmatpush1.bf16.msra.mxu0 0
  %106 = vmatprep.subr.bf16.mxu0 0
  %107 = vmatpush1.bf16.msra.mxu0 0
  %108 = vmatprep.subr.bf16.mxu0 0
  %109 = vmatpush1.bf16.msra.mxu0 0
  %110 = vmatprep.subr.bf16.mxu0 0
  %111 = vmatpush1.bf16.msra.mxu0 0
  %112 = vmatprep.subr.bf16.mxu0 0
  %113 = vmatpush1.bf16.msra.mxu0 0
  %114 = vmatprep.subr.bf16.mxu0 0
  %115 = vmatpush1.bf16.msra.mxu0 0
  %116 = vmatprep.subr.bf16.mxu0 0
  %117 = vmatpush1.bf16.msra.mxu0 0
  %118 = vmatprep.subr.bf16.mxu0 0
  %119 = vmatpush1.bf16.msra.mxu0 0
  %120 = vmatprep.subr.bf16.mxu0 0
  %121 = vmatpush1.bf16.msra.mxu0 0
  %122 = vmatprep.subr.bf16.mxu0 0
  %123 = vmatpush1.bf16.msra.mxu0 0
  %124 = vmatprep.mubr.bf16.mxu0 0
  %125 = vmatmul.mubr.bf16.gmra.mrb[0].mxu0 %v81
  %v126 = vpop.f32.mrb[0].mxu0
  %v127 = vadd.f32 0.0, %v126
  %v128 = vpop.f32.mrb[0].mxu0
  %v129 = vpop.f32.mrb[0].mxu0
  %v130 = vadd.f32 0.0, %v129
  %v131 = vpop.f32.mrb[0].mxu0
  %132 = vmatprep.mubr.bf16.mxu0 0
  %133 = vmatmul.mubr.bf16.gmra.mrb[0].mxu0 %v84
  %v134 = vpop.f32.mrb[0].mxu0
  %v135 = vadd.f32 0.0, %v134
  %v136 = vpop.f32.mrb[0].mxu0
  %v137 = vpop.f32.mrb[0].mxu0
  %v138 = vadd.f32 0.0, %v137
  %v139 = vpop.f32.mrb[0].mxu0
  %140 = vmatprep.mubr.bf16.mxu0 0
  %141 = vmatmul.mubr.bf16.gmra.mrb[0].mxu0 %v87
  %v142 = vpop.f32.mrb[0].mxu0
  %v143 = vadd.f32 0.0, %v142
  %v144 = vpop.f32.mrb[0].mxu0
  %v145 = vpop.f32.mrb[0].mxu0
  %v146 = vadd.f32 0.0, %v145
  %v147 = vpop.f32.mrb[0].mxu0
  %148 = vmatprep.mubr.bf16.mxu0 0
  %149 = vmatmul.mubr.bf16.gmra.mrb[0].mxu0 %v90
  %v150 = vpop.f32.mrb[0].mxu0
  %v151 = vadd.f32 0.0, %v150
  %v152 = vpop.f32.mrb[0].mxu0
  %v153 = vpop.f32.mrb[0].mxu0
  %v154 = vadd.f32 0.0, %v153
  %v155 = vpop.f32.mrb[0].mxu0
  %156 = vdwg.mxu0
  %v165 = vunpack.c.l.b16 %v33
  %v166 = vunpack.c.l.b16 %v34
  %v167 = vunpack.c.l.b16 %v35
  %v168 = vunpack.c.l.b16 %v36
  %v169 = vunpack.c.l.b16 %v37
  %v170 = vunpack.c.l.b16 %v38
  %v171 = vunpack.c.l.b16 %v39
  %v172 = vunpack.c.l.b16 %v40
  %v173 = vpack.c.b16 %v166, %v165
  %v174 = vpack.c.b16 %v168, %v167
  %v175 = vpack.c.b16 %v170, %v169
  %v176 = vpack.c.b16 %v172, %v171
  %v179 = vunpack.c.l.b16 %v41
  %v180 = vunpack.c.l.b16 %v42
  %v181 = vpack.c.b16 %v180, %v179
  %v184 = vsel %vm79, %v173, 0
  %v187 = vsel %vm79, %v174, 0
  %v190 = vsel %vm79, %v175, 0
  %v193 = vsel %vm79, %v176, 0
  %195 = vmatprep.subr.bf16.mxu0 0
  %196 = vmatpush1.bf16.msra.mxu0 %v181
  %197 = vmatprep.subr.bf16.mxu0 0
  %198 = vmatpush1.bf16.msra.mxu0 0
  %199 = vmatprep.subr.bf16.mxu0 0
  %200 = vmatpush1.bf16.msra.mxu0 0
  %201 = vmatprep.subr.bf16.mxu0 0
  %202 = vmatpush1.bf16.msra.mxu0 0
  %203 = vmatprep.subr.bf16.mxu0 0
  %204 = vmatpush1.bf16.msra.mxu0 0
  %205 = vmatprep.subr.bf16.mxu0 0
  %206 = vmatpush1.bf16.msra.mxu0 0
  %207 = vmatprep.subr.bf16.mxu0 0
  %208 = vmatpush1.bf16.msra.mxu0 0
  %209 = vmatprep.subr.bf16.mxu0 0
  %210 = vmatpush1.bf16.msra.mxu0 0
  %211 = vmatprep.subr.bf16.mxu0 0
  %212 = vmatpush1.bf16.msra.mxu0 0
  %213 = vmatprep.subr.bf16.mxu0 0
  %214 = vmatpush1.bf16.msra.mxu0 0
  %215 = vmatprep.subr.bf16.mxu0 0
  %216 = vmatpush1.bf16.msra.mxu0 0
  %217 = vmatprep.subr.bf16.mxu0 0
  %218 = vmatpush1.bf16.msra.mxu0 0
  %219 = vmatprep.subr.bf16.mxu0 0
  %220 = vmatpush1.bf16.msra.mxu0 0
  %221 = vmatprep.subr.bf16.mxu0 0
  %222 = vmatpush1.bf16.msra.mxu0 0
  %223 = vmatprep.subr.bf16.mxu0 0
  %224 = vmatpush1.bf16.msra.mxu0 0
  %225 = vmatprep.subr.bf16.mxu0 0
  %226 = vmatpush1.bf16.msra.mxu0 0
  %227 = vmatprep.mubr.bf16.mxu0 0
  %228 = vmatmul.mubr.bf16.gmra.mrb[0].mxu0 %v184
  %v229 = vpop.f32.mrb[0].mxu0
  %v230 = vadd.f32 %v127, %v229
  %v231 = vpop.f32.mrb[0].mxu0
  %v232 = vpop.f32.mrb[0].mxu0
  %v233 = vadd.f32 %v130, %v232
  %v234 = vpop.f32.mrb[0].mxu0
  %235 = vmatprep.mubr.bf16.mxu0 0
  %236 = vmatmul.mubr.bf16.gmra.mrb[0].mxu0 %v187
  %v237 = vpop.f32.mrb[0].mxu0
  %v238 = vadd.f32 %v135, %v237
  %v239 = vpop.f32.mrb[0].mxu0
  %v240 = vpop.f32.mrb[0].mxu0
  %v241 = vadd.f32 %v138, %v240
  %v242 = vpop.f32.mrb[0].mxu0
  %243 = vmatprep.mubr.bf16.mxu0 0
  %244 = vmatmul.mubr.bf16.gmra.mrb[0].mxu0 %v190
  %v245 = vpop.f32.mrb[0].mxu0
  %v246 = vadd.f32 %v143, %v245
  %v247 = vpop.f32.mrb[0].mxu0
  %v248 = vpop.f32.mrb[0].mxu0
  %v249 = vadd.f32 %v146, %v248
  %v250 = vpop.f32.mrb[0].mxu0
  %251 = vmatprep.mubr.bf16.mxu0 0
  %252 = vmatmul.mubr.bf16.gmra.mrb[0].mxu0 %v193
  %v253 = vpop.f32.mrb[0].mxu0
  %v254 = vadd.f32 %v151, %v253
  %v255 = vpop.f32.mrb[0].mxu0
  %v256 = vpop.f32.mrb[0].mxu0
  %v257 = vadd.f32 %v154, %v256
  %v258 = vpop.f32.mrb[0].mxu0
  %259 = vdwg.mxu0
  %v260 = vld [vmem:[%s4] sm:$0xff]
  %v261 = vld [vmem:[%s4 + $0x8] sm:$0xff]
  %v262 = vld [vmem:[%s4 + $0x10] sm:$0xff]
  %v263 = vld [vmem:[%s4 + $0x18] sm:$0xff]
  %v264 = vld [vmem:[%s4 + $0x20] sm:$0xff]
  %v265 = vld [vmem:[%s4 + $0x28] sm:$0xff]
  %v266 = vld [vmem:[%s4 + $0x30] sm:$0xff]
  %v267 = vld [vmem:[%s4 + $0x38] sm:$0xff]
  %269 = vset.pattern.permute.xlu0 0
  %270 = vperm.xlu0 %269, %v260
  %v271 = vpop.permute.xlu0 %270
  %274 = vset.pattern.permute.xlu0 0
  %275 = vperm.xlu0 %274, %v261
  %v276 = vpop.permute.xlu0 %275
  %279 = vset.pattern.permute.xlu0 0
  %280 = vperm.xlu0 %279, %v262
  %v281 = vpop.permute.xlu0 %280
  %284 = vset.pattern.permute.xlu0 0
  %285 = vperm.xlu0 %284, %v263
  %v286 = vpop.permute.xlu0 %285
  %289 = vset.pattern.permute.xlu0 0
  %290 = vperm.xlu0 %289, %v264
  %v291 = vpop.permute.xlu0 %290
  %294 = vset.pattern.permute.xlu0 0
  %295 = vperm.xlu0 %294, %v265
  %v296 = vpop.permute.xlu0 %295
  %299 = vset.pattern.permute.xlu0 0
  %300 = vperm.xlu0 %299, %v266
  %v301 = vpop.permute.xlu0 %300
  %304 = vset.pattern.permute.xlu0 0
  %305 = vperm.xlu0 %304, %v267
  %v306 = vpop.permute.xlu0 %305
  %v308 = vadd.f32 %v230, %v271
  %v309 = vadd.f32 %v233, %v276
  %v310 = vadd.f32 %v238, %v281
  %v311 = vadd.f32 %v241, %v286
  %v312 = vadd.f32 %v246, %v291
  %v313 = vadd.f32 %v249, %v296
  %v314 = vadd.f32 %v254, %v301
  %v315 = vadd.f32 %v257, %v306
  %v316 = vmax.f32 %v308, 0.0
  %v317 = vmax.f32 %v309, 0.0
  %v318 = vmax.f32 %v310, 0.0
  %v319 = vmax.f32 %v311, 0.0
  %v320 = vmax.f32 %v312, 0.0
  %v321 = vmax.f32 %v313, 0.0
  %v322 = vmax.f32 %v314, 0.0
  %v323 = vmax.f32 %v315, 0.0
  %v324 = vld [vmem:[%s5] sm:$0xf]
  %v325 = vld [vmem:[%s5 + $0x4] sm:$0xf]
  %v326 = vld [vmem:[%s5 + $0x8] sm:$0xf]
  %v327 = vld [vmem:[%s5 + $0xc] sm:$0xf]
  %v328 = vpack.c.bf16 %v317, %v316
  %v329 = vpack.c.bf16 %v319, %v318
  %v330 = vpack.c.bf16 %v321, %v320
  %v331 = vpack.c.bf16 %v323, %v322
  %v332 = vld [vmem:[%s6] sm:$0xff]
  %v333 = vld [vmem:[%s6 + $0x8] sm:$0xff]
  %v334 = vld [vmem:[%s6 + $0x10] sm:$0xff]
  %v335 = vld [vmem:[%s6 + $0x18] sm:$0xff]
  %337 = vset.pattern.permute.xlu0 0
  %338 = vperm.xlu0 %337, %v332
  %v339 = vpop.permute.xlu0 %338
  %342 = vset.pattern.permute.xlu0 0
  %343 = vperm.xlu0 %342, %v333
  %v344 = vpop.permute.xlu0 %343
  %347 = vset.pattern.permute.xlu0 0
  %348 = vperm.xlu0 %347, %v334
  %v349 = vpop.permute.xlu0 %348
  %352 = vset.pattern.permute.xlu0 0
  %353 = vperm.xlu0 %352, %v335
  %v354 = vpop.permute.xlu0 %353
  %v360 = vunpack.c.l.b16 %v324
  %v361 = vunpack.c.l.b16 %v325
  %v362 = vunpack.c.l.b16 %v326
  %v363 = vunpack.c.l.b16 %v327
  %v364 = vpack.c.b16 %v361, %v360
  %v365 = vpack.c.b16 %v363, %v362
  %vm366 = vcmask 523264
  %v368 = vsel %vm366, %v364, 0
  %v371 = vsel %vm366, %v365, 0
  %373 = vmatprep.subr.bf16.mxu0 0
  %374 = vmatpush1.bf16.msra.mxu0 %v328
  %375 = vmatprep.subr.bf16.mxu0 0
  %376 = vmatpush1.bf16.msra.mxu0 %v329
  %377 = vmatprep.subr.bf16.mxu0 0
  %378 = vmatpush1.bf16.msra.mxu0 %v330
  %379 = vmatprep.subr.bf16.mxu0 0
  %380 = vmatpush1.bf16.msra.mxu0 %v331
  %381 = vmatprep.subr.bf16.mxu0 0
  %382 = vmatpush1.bf16.msra.mxu0 0
  %383 = vmatprep.subr.bf16.mxu0 0
  %384 = vmatpush1.bf16.msra.mxu0 0
  %385 = vmatprep.subr.bf16.mxu0 0
  %386 = vmatpush1.bf16.msra.mxu0 0
  %387 = vmatprep.subr.bf16.mxu0 0
  %388 = vmatpush1.bf16.msra.mxu0 0
  %389 = vmatprep.subr.bf16.mxu0 0
  %390 = vmatpush1.bf16.msra.mxu0 0
  %391 = vmatprep.subr.bf16.mxu0 0
  %392 = vmatpush1.bf16.msra.mxu0 0
  %393 = vmatprep.subr.bf16.mxu0 0
  %394 = vmatpush1.bf16.msra.mxu0 0
  %395 = vmatprep.subr.bf16.mxu0 0
  %396 = vmatpush1.bf16.msra.mxu0 0
  %397 = vmatprep.subr.bf16.mxu0 0
  %398 = vmatpush1.bf16.msra.mxu0 0
  %399 = vmatprep.subr.bf16.mxu0 0
  %400 = vmatpush1.bf16.msra.mxu0 0
  %401 = vmatprep.subr.bf16.mxu0 0
  %402 = vmatpush1.bf16.msra.mxu0 0
  %403 = vmatprep.subr.bf16.mxu0 0
  %404 = vmatpush1.bf16.msra.mxu0 0
  %405 = vmatprep.mubr.bf16.mxu0 0
  %406 = vmatmul.mubr.bf16.gmra.mrb[0].mxu0 %v368
  %v407 = vpop.f32.mrb[0].mxu0
  %v408 = vadd.f32 %v339, %v407
  %v409 = vpop.f32.mrb[0].mxu0
  %v410 = vpop.f32.mrb[0].mxu0
  %v411 = vadd.f32 %v344, %v410
  %v412 = vpop.f32.mrb[0].mxu0
  %413 = vmatprep.mubr.bf16.mxu0 0
  %414 = vmatmul.mubr.bf16.gmra.mrb[0].mxu0 %v371
  %v415 = vpop.f32.mrb[0].mxu0
  %v416 = vadd.f32 %v349, %v415
  %v417 = vpop.f32.mrb[0].mxu0
  %v418 = vpop.f32.mrb[0].mxu0
  %v419 = vadd.f32 %v354, %v418
  %v420 = vpop.f32.mrb[0].mxu0
  %421 = vdwg.mxu0
  %v422 = vmax.f32 %v408, 0.0
  %v423 = vmax.f32 %v411, 0.0
  %v424 = vmax.f32 %v416, 0.0
  %v425 = vmax.f32 %v419, 0.0
  %v426 = vld [vmem:[%s7] sm:$0xf]
  %v427 = vld [vmem:[%s7 + $0x4] sm:$0xf]
  %v428 = vpack.c.bf16 %v423, %v422
  %v429 = vpack.c.bf16 %v425, %v424
  %v430 = vld [vmem:[%s8] sm:$0xff]
  %v431 = vld [vmem:[%s8 + $0x8] sm:$0xff]
  %433 = vset.pattern.permute.xlu0 0
  %434 = vperm.xlu0 %433, %v430
  %v435 = vpop.permute.xlu0 %434
  %438 = vset.pattern.permute.xlu0 0
  %439 = vperm.xlu0 %438, %v431
  %v440 = vpop.permute.xlu0 %439
  %v444 = vunpack.c.l.b16 %v426
  %v445 = vunpack.c.l.b16 %v427
  %v446 = vpack.c.b16 %v445, %v444
  %vm447 = vcmask 261120
  %v449 = vsel %vm447, %v446, 0
  %451 = vmatprep.subr.bf16.mxu0 0
  %452 = vmatpush1.bf16.msra.mxu0 %v428
  %453 = vmatprep.subr.bf16.mxu0 0
  %454 = vmatpush1.bf16.msra.mxu0 %v429
  %455 = vmatprep.subr.bf16.mxu0 0
  %456 = vmatpush1.bf16.msra.mxu0 0
  %457 = vmatprep.subr.bf16.mxu0 0
  %458 = vmatpush1.bf16.msra.mxu0 0
  %459 = vmatprep.subr.bf16.mxu0 0
  %460 = vmatpush1.bf16.msra.mxu0 0
  %461 = vmatprep.subr.bf16.mxu0 0
  %462 = vmatpush1.bf16.msra.mxu0 0
  %463 = vmatprep.subr.bf16.mxu0 0
  %464 = vmatpush1.bf16.msra.mxu0 0
  %465 = vmatprep.subr.bf16.mxu0 0
  %466 = vmatpush1.bf16.msra.mxu0 0
  %467 = vmatprep.subr.bf16.mxu0 0
  %468 = vmatpush1.bf16.msra.mxu0 0
  %469 = vmatprep.subr.bf16.mxu0 0
  %470 = vmatpush1.bf16.msra.mxu0 0
  %471 = vmatprep.subr.bf16.mxu0 0
  %472 = vmatpush1.bf16.msra.mxu0 0
  %473 = vmatprep.subr.bf16.mxu0 0
  %474 = vmatpush1.bf16.msra.mxu0 0
  %475 = vmatprep.subr.bf16.mxu0 0
  %476 = vmatpush1.bf16.msra.mxu0 0
  %477 = vmatprep.subr.bf16.mxu0 0
  %478 = vmatpush1.bf16.msra.mxu0 0
  %479 = vmatprep.subr.bf16.mxu0 0
  %480 = vmatpush1.bf16.msra.mxu0 0
  %481 = vmatprep.subr.bf16.mxu0 0
  %482 = vmatpush1.bf16.msra.mxu0 0
  %483 = vmatprep.mubr.bf16.mxu0 0
  %484 = vmatmul.mubr.bf16.gmra.mrb[0].mxu0 %v449
  %v485 = vpop.f32.mrb[0].mxu0
  %v486 = vadd.f32 %v435, %v485
  %v487 = vpop.f32.mrb[0].mxu0
  %v488 = vpop.f32.mrb[0].mxu0
  %v489 = vadd.f32 %v440, %v488
  %v490 = vpop.f32.mrb[0].mxu0
  %491 = vdwg.mxu0
  %vm492 = vcmask 64512
  %493 = vst.msk [vmem:[%s9] sm:$0xff] %vm492, %v486
  %494 = vst.msk [vmem:[%s9 + $0x8] sm:$0xff] %vm492, %v489
  // Predicated region
  $region38: #{tpu_custom_call.1} parent=0 // pred_check
    _
  $region39: #{tpu_custom_call.1} parent=0 // pred_check_branch
    %496 = sbr.rel (0) target = $region41
  $region40: #{tpu_custom_call.1} parent=0 // pred_region
    _
  $region41: #{tpu_custom_call.1} parent=0 // pred_fallthru
    _
  // Predicated region
  $region42: #{tpu_custom_call.1} parent=0 // pred_check
    _
  $region43: #{tpu_custom_call.1} parent=0 // pred_check_branch
    %498 = sbr.rel (0) target = $region45
  $region44: #{tpu_custom_call.1} parent=0 // pred_region
    _
  $region45: #{tpu_custom_call.1} parent=0 // pred_fallthru
    _

</llo_original>
